<compile_context>
chip_gen: v7x
topology: tpu7x:2x2x1
jax: 0.10.0
libtpu: 0.0.40
codegen_flags: <defaults>
</compile_context>

<pallas_src>
import jax
import jax.numpy as jnp
from jax.experimental import pallas as pl
from jax.experimental.pallas import tpu as pltpu


_NEG_BIG = -1e30  # fill for padded-class bias lanes; exp() underflows to exactly 0


def _round_up(x, m):
    return (x + m - 1) // m * m


def mlp_softmax_kernel(x_ref, w0_ref, b0_ref, w1_ref, b1_ref,
                       w2_ref, b2_ref, w3_ref, b3_ref, o_ref):
    """One batch tile: 4 Linear layers (ReLU after the first two) + softmax.

    w3/b3 are padded along the class axis to a multiple of 128 lanes; padded
    bias lanes hold -1e30 so they contribute exactly 0 to the softmax.
    The first three layers (n_data->n_data->20->n_data) are tiny and left as
    plain in-VMEM matmuls — they are FLOP noise relative to the final layer.
    """
    x = x_ref[...]
    wdt = w0_ref.dtype  # matmul operand dtype (f32 or bf16); accumulation is f32

    # Linear(n_data, n_data) + ReLU
    h = jnp.dot(x.astype(wdt), w0_ref[...],
                preferred_element_type=jnp.float32) + b0_ref[...]
    h = jnp.maximum(h, 0.0)

    # Linear(n_data, 20) + ReLU
    h = jnp.dot(h.astype(wdt), w1_ref[...],
                preferred_element_type=jnp.float32) + b1_ref[...]
    h = jnp.maximum(h, 0.0)

    # Linear(20, n_data)
    h = jnp.dot(h.astype(wdt), w2_ref[...],
                preferred_element_type=jnp.float32) + b2_ref[...]

    # Linear(n_data, 2**n_data), class dim padded to lane-dense width
    logits = jnp.dot(h.astype(wdt), w3_ref[...],
                     preferred_element_type=jnp.float32) + b3_ref[...]

    # softmax over the (padded) class axis; padded lanes are -1e30 -> exp == 0
    m = jnp.max(logits, axis=1, keepdims=True)
    e = jnp.exp(logits - m)
    denom = jnp.sum(e, axis=1, keepdims=True)
    o_ref[...] = (e * pl.reciprocal(denom)).astype(o_ref.dtype)


def qgraph_classic_8_softmax_forward(x, params, *, weight_dtype=jnp.float32,
                                     max_batch_tile=256):
    """x: (B, n_data) f32; params: dict of transposed weights (in,out) + biases (1,out)."""
    B, n_data = x.shape
    n_out = params["w3"].shape[1]
    n_out_pad = max(128, _round_up(n_out, 128))

    # --- Pad final layer along the class axis for a lane-dense output block. ---
    w3 = params["w3"]
    b3 = params["b3"]
    if n_out_pad != n_out:
        w3 = jnp.pad(w3, ((0, 0), (0, n_out_pad - n_out)))
        b3 = jnp.pad(b3, ((0, 0), (0, n_out_pad - n_out)),
                     constant_values=_NEG_BIG)

    # --- Optional bf16 weight streaming (halves HBM traffic on w3). ---
    w0 = params["w0"].astype(weight_dtype)
    w1 = params["w1"].astype(weight_dtype)
    w2 = params["w2"].astype(weight_dtype)
    w3 = w3.astype(weight_dtype)
    b0 = params["b0"].astype(jnp.float32)
    b1 = params["b1"].astype(jnp.float32)
    b2 = params["b2"].astype(jnp.float32)
    b3 = b3.astype(jnp.float32)

    # --- Batch tile: largest power-of-two (>=8) that keeps double-buffered ---
    # --- x/out tiles + f32 temps well under the v7x 64 MiB VMEM budget.     ---
    budget = 40 * 1024 * 1024
    tb = max_batch_tile
    while tb > 8 and (2 * tb * n_out_pad * 4) * 4 > budget:
        tb //= 2
    tb = min(tb, max(8, _round_up(B, 8)))
    B_pad = _round_up(B, tb)
    if B_pad != B:
        x = jnp.pad(x, ((0, B_pad - B), (0, 0)))

    wbytes = jnp.dtype(weight_dtype).itemsize
    vmem_est = (2 * wbytes * (w0.size + w1.size + w2.size + w3.size)   # resident weights (x2 buffering)
                + 2 * 4 * (b0.size + b1.size + b2.size + b3.size)      # resident biases
                + 2 * tb * (n_data + n_out_pad) * 4                    # double-buffered x/out tiles
                + 3 * tb * n_out_pad * 4)                              # in-kernel f32 temporaries
    vmem_limit = int(min(max(2 * vmem_est, 32 * 1024 * 1024), 48 * 1024 * 1024))

    def resident(arr):
        # Full array as one block, same block every grid step -> stays VMEM-resident.
        nd = arr.ndim
        return pl.BlockSpec(arr.shape, lambda i, _nd=nd: (0,) * _nd)

    out_pad = pl.pallas_call(
        mlp_softmax_kernel,
        out_shape=jax.ShapeDtypeStruct((B_pad, n_out_pad), jnp.float32),
        grid=(B_pad // tb,),
        in_specs=[
            pl.BlockSpec((tb, n_data), lambda i: (i, 0)),   # x: batch-tiled
            resident(w0), resident(b0),
            resident(w1), resident(b1),
            resident(w2), resident(b2),
            resident(w3), resident(b3),
        ],
        out_specs=pl.BlockSpec((tb, n_out_pad), lambda i: (i, 0)),  # lane-dense
        compiler_params=pltpu.CompilerParams(
            dimension_semantics=("parallel",),
            vmem_limit_bytes=vmem_limit,
        ),
    )(x, w0, b0, w1, b1, w2, b2, w3, b3)

    # Drop batch/class padding.
    return out_pad[:B, :n_out]


def init_params(key, n_data, hidden=20):
    """Deterministic init mimicking torch.nn.Linear (uniform +/- 1/sqrt(fan_in)).
    Weights stored transposed: (in_features, out_features)."""
    n_out = 2 ** n_data
    dims = [(n_data, n_data), (n_data, hidden), (hidden, n_data), (n_data, n_out)]
    params = {}
    for i, (fin, fout) in enumerate(dims):
        key, kw, kb = jax.random.split(key, 3)
        bound = 1.0 / (fin ** 0.5)
        params[f"w{i}"] = jax.random.uniform(
            kw, (fin, fout), jnp.float32, minval=-bound, maxval=bound)
        params[f"b{i}"] = jax.random.uniform(
            kb, (1, fout), jnp.float32, minval=-bound, maxval=bound)
    return params


def reference_forward(x, params):
    h = jnp.maximum(x @ params["w0"] + params["b0"], 0.0)
    h = jnp.maximum(h @ params["w1"] + params["b1"], 0.0)
    h = h @ params["w2"] + params["b2"]
    logits = h @ params["w3"] + params["b3"]
    return jax.nn.softmax(logits, axis=1)


if __name__ == "__main__":
    n_data = 4          # -> 2**4 = 16 output classes (padded to 128 lanes internally)
    batch = 8
    key = jax.random.PRNGKey(0)
    key, kx = jax.random.split(key)

    x = jax.random.normal(kx, (batch, n_data), jnp.float32)
    params = init_params(key, n_data)

    out = qgraph_classic_8_softmax_forward(x, params)
    out = jax.block_until_ready(out)

    ref = reference_forward(x, params)
    assert out.shape == (batch, 2 ** n_data)
    assert jnp.allclose(out, ref, atol=1e-5, rtol=1e-5)
    assert jnp.allclose(jnp.sum(out, axis=1), 1.0, atol=1e-5)

    print("KERNEL_OK")
</pallas_src>

<mosaic_0001>
module attributes {stable_mosaic.version = 11 : i64} {
  func.func @mlp_softmax_kernel(%arg0: i32, %arg1: memref<8x4xf32, #tpu.memory_space<vmem>>, %arg2: memref<4x4xf32, #tpu.memory_space<vmem>>, %arg3: memref<1x4xf32, #tpu.memory_space<vmem>>, %arg4: memref<4x20xf32, #tpu.memory_space<vmem>>, %arg5: memref<1x20xf32, #tpu.memory_space<vmem>>, %arg6: memref<20x4xf32, #tpu.memory_space<vmem>>, %arg7: memref<1x4xf32, #tpu.memory_space<vmem>>, %arg8: memref<4x128xf32, #tpu.memory_space<vmem>>, %arg9: memref<1x128xf32, #tpu.memory_space<vmem>>, %arg10: memref<8x128xf32, #tpu.memory_space<vmem>>) attributes {dimension_semantics = [#tpu.dimension_semantics<parallel>], iteration_bounds = array<i64: 1>, scalar_prefetch = 0 : i64, scratch_operands = 0 : i64, tpu.core_type = #tpu.core_type<tc>, window_params = [{transform_indices = @transform_0, window_bounds = array<i64: 8, 4>}, {pipeline_mode = #tpu.pipeline_mode<synchronous>, transform_indices = @transform_1, window_bounds = array<i64: 4, 4>}, {pipeline_mode = #tpu.pipeline_mode<synchronous>, transform_indices = @transform_2, window_bounds = array<i64: 1, 4>}, {pipeline_mode = #tpu.pipeline_mode<synchronous>, transform_indices = @transform_3, window_bounds = array<i64: 4, 20>}, {pipeline_mode = #tpu.pipeline_mode<synchronous>, transform_indices = @transform_4, window_bounds = array<i64: 1, 20>}, {pipeline_mode = #tpu.pipeline_mode<synchronous>, transform_indices = @transform_5, window_bounds = array<i64: 20, 4>}, {pipeline_mode = #tpu.pipeline_mode<synchronous>, transform_indices = @transform_6, window_bounds = array<i64: 1, 4>}, {pipeline_mode = #tpu.pipeline_mode<synchronous>, transform_indices = @transform_7, window_bounds = array<i64: 4, 128>}, {pipeline_mode = #tpu.pipeline_mode<synchronous>, transform_indices = @transform_8, window_bounds = array<i64: 1, 128>}, {transform_indices = @transform_9, window_bounds = array<i64: 8, 128>}]} {
    %c0 = arith.constant 0 : index
    %c0_0 = arith.constant 0 : index
    %0 = vector.load %arg1[%c0, %c0_0] : memref<8x4xf32, #tpu.memory_space<vmem>>, vector<8x4xf32>
    %c0_1 = arith.constant 0 : index
    %c0_2 = arith.constant 0 : index
    %1 = vector.load %arg2[%c0_1, %c0_2] : memref<4x4xf32, #tpu.memory_space<vmem>>, vector<4x4xf32>
    %cst = arith.constant dense<0.000000e+00> : vector<8x4xf32>
    %2 = tpu.matmul %0, %1, %cst {dimension_numbers = #tpu.dot_dimension_numbers<[1], [0], [0], [1], [0, 0, 1, 1], [], []>} : vector<8x4xf32>, vector<4x4xf32>, vector<8x4xf32> -> vector<8x4xf32>
    %c0_3 = arith.constant 0 : index
    %c0_4 = arith.constant 0 : index
    %3 = vector.load %arg3[%c0_3, %c0_4] : memref<1x4xf32, #tpu.memory_space<vmem>>, vector<1x4xf32>
    %4 = vector.broadcast %3 : vector<1x4xf32> to vector<8x4xf32>
    %5 = arith.addf %2, %4 : vector<8x4xf32>
    %cst_5 = arith.constant 0.000000e+00 : f32
    %6 = vector.broadcast %cst_5 : f32 to vector<8x4xf32>
    %7 = arith.maximumf %5, %6 : vector<8x4xf32>
    %c0_6 = arith.constant 0 : index
    %c0_7 = arith.constant 0 : index
    %8 = vector.load %arg4[%c0_6, %c0_7] : memref<4x20xf32, #tpu.memory_space<vmem>>, vector<4x20xf32>
    %cst_8 = arith.constant dense<0.000000e+00> : vector<8x20xf32>
    %9 = tpu.matmul %7, %8, %cst_8 {dimension_numbers = #tpu.dot_dimension_numbers<[1], [0], [0], [1], [0, 0, 1, 1], [], []>} : vector<8x4xf32>, vector<4x20xf32>, vector<8x20xf32> -> vector<8x20xf32>
    %c0_9 = arith.constant 0 : index
    %c0_10 = arith.constant 0 : index
    %10 = vector.load %arg5[%c0_9, %c0_10] : memref<1x20xf32, #tpu.memory_space<vmem>>, vector<1x20xf32>
    %11 = vector.broadcast %10 : vector<1x20xf32> to vector<8x20xf32>
    %12 = arith.addf %9, %11 : vector<8x20xf32>
    %cst_11 = arith.constant 0.000000e+00 : f32
    %13 = vector.broadcast %cst_11 : f32 to vector<8x20xf32>
    %14 = arith.maximumf %12, %13 : vector<8x20xf32>
    %c0_12 = arith.constant 0 : index
    %c0_13 = arith.constant 0 : index
    %15 = vector.load %arg6[%c0_12, %c0_13] : memref<20x4xf32, #tpu.memory_space<vmem>>, vector<20x4xf32>
    %cst_14 = arith.constant dense<0.000000e+00> : vector<8x4xf32>
    %16 = tpu.matmul %14, %15, %cst_14 {dimension_numbers = #tpu.dot_dimension_numbers<[1], [0], [0], [1], [0, 0, 1, 1], [], []>} : vector<8x20xf32>, vector<20x4xf32>, vector<8x4xf32> -> vector<8x4xf32>
    %c0_15 = arith.constant 0 : index
    %c0_16 = arith.constant 0 : index
    %17 = vector.load %arg7[%c0_15, %c0_16] : memref<1x4xf32, #tpu.memory_space<vmem>>, vector<1x4xf32>
    %18 = vector.broadcast %17 : vector<1x4xf32> to vector<8x4xf32>
    %19 = arith.addf %16, %18 : vector<8x4xf32>
    %c0_17 = arith.constant 0 : index
    %c0_18 = arith.constant 0 : index
    %20 = vector.load %arg8[%c0_17, %c0_18] : memref<4x128xf32, #tpu.memory_space<vmem>>, vector<4x128xf32>
    %cst_19 = arith.constant dense<0.000000e+00> : vector<8x128xf32>
    %21 = tpu.matmul %19, %20, %cst_19 {dimension_numbers = #tpu.dot_dimension_numbers<[1], [0], [0], [1], [0, 0, 1, 1], [], []>} : vector<8x4xf32>, vector<4x128xf32>, vector<8x128xf32> -> vector<8x128xf32>
    %c0_20 = arith.constant 0 : index
    %c0_21 = arith.constant 0 : index
    %22 = vector.load %arg9[%c0_20, %c0_21] : memref<1x128xf32, #tpu.memory_space<vmem>>, vector<1x128xf32>
    %23 = vector.broadcast %22 : vector<1x128xf32> to vector<8x128xf32>
    %24 = arith.addf %21, %23 : vector<8x128xf32>
    %cst_22 = arith.constant dense<0xFF800000> : vector<8xf32>
    %25 = vector.multi_reduction <maximumf>, %24, %cst_22 [1] : vector<8x128xf32> to vector<8xf32>
    %26 = vector.shape_cast %25 : vector<8xf32> to vector<8x1xf32>
    %27 = vector.broadcast %26 : vector<8x1xf32> to vector<8x128xf32>
    %28 = arith.subf %24, %27 : vector<8x128xf32>
    %29 = math.exp %28 : vector<8x128xf32>
    %cst_23 = arith.constant dense<0.000000e+00> : vector<8xf32>
    %30 = vector.multi_reduction <add>, %29, %cst_23 [1] : vector<8x128xf32> to vector<8xf32>
    %31 = vector.shape_cast %30 : vector<8xf32> to vector<8x1xf32>
    %32 = tpu.reciprocal %31 : vector<8x1xf32> -> vector<8x1xf32>
    %33 = vector.broadcast %32 : vector<8x1xf32> to vector<8x128xf32>
    %34 = arith.mulf %29, %33 : vector<8x128xf32>
    %c0_24 = arith.constant 0 : index
    %c0_25 = arith.constant 0 : index
    %35 = vector.load %arg10[%c0_24, %c0_25] : memref<8x128xf32, #tpu.memory_space<vmem>>, vector<8x128xf32>
    tpu.vector_store %arg10[%c0_24, %c0_25], %34 {strides = array<i32>} : memref<8x128xf32, #tpu.memory_space<vmem>>, vector<8x128xf32>,
    return
  }
  func.func @transform_0(%arg0: i32) -> (i32, i32) {
    %c0_i32 = arith.constant 0 : i32
    %c0_i32_0 = arith.constant 0 : i32
    return %arg0, %c0_i32 : i32, i32
  }
  func.func @transform_1(%arg0: i32) -> (i32, i32) {
    %c0_i32 = arith.constant 0 : i32
    %c0_i32_0 = arith.constant 0 : i32
    %c0_i32_1 = arith.constant 0 : i32
    return %c0_i32, %c0_i32_0 : i32, i32
  }
  func.func @transform_2(%arg0: i32) -> (i32, i32) {
    %c0_i32 = arith.constant 0 : i32
    %c0_i32_0 = arith.constant 0 : i32
    %c0_i32_1 = arith.constant 0 : i32
    return %c0_i32, %c0_i32_0 : i32, i32
  }
  func.func @transform_3(%arg0: i32) -> (i32, i32) {
    %c0_i32 = arith.constant 0 : i32
    %c0_i32_0 = arith.constant 0 : i32
    %c0_i32_1 = arith.constant 0 : i32
    return %c0_i32, %c0_i32_0 : i32, i32
  }
  func.func @transform_4(%arg0: i32) -> (i32, i32) {
    %c0_i32 = arith.constant 0 : i32
    %c0_i32_0 = arith.constant 0 : i32
    %c0_i32_1 = arith.constant 0 : i32
    return %c0_i32, %c0_i32_0 : i32, i32
  }
  func.func @transform_5(%arg0: i32) -> (i32, i32) {
    %c0_i32 = arith.constant 0 : i32
    %c0_i32_0 = arith.constant 0 : i32
    %c0_i32_1 = arith.constant 0 : i32
    return %c0_i32, %c0_i32_0 : i32, i32
  }
  func.func @transform_6(%arg0: i32) -> (i32, i32) {
    %c0_i32 = arith.constant 0 : i32
    %c0_i32_0 = arith.constant 0 : i32
    %c0_i32_1 = arith.constant 0 : i32
    return %c0_i32, %c0_i32_0 : i32, i32
  }
  func.func @transform_7(%arg0: i32) -> (i32, i32) {
    %c0_i32 = arith.constant 0 : i32
    %c0_i32_0 = arith.constant 0 : i32
    %c0_i32_1 = arith.constant 0 : i32
    return %c0_i32, %c0_i32_0 : i32, i32
  }
  func.func @transform_8(%arg0: i32) -> (i32, i32) {
    %c0_i32 = arith.constant 0 : i32
    %c0_i32_0 = arith.constant 0 : i32
    %c0_i32_1 = arith.constant 0 : i32
    return %c0_i32, %c0_i32_0 : i32, i32
  }
  func.func @transform_9(%arg0: i32) -> (i32, i32) {
    %c0_i32 = arith.constant 0 : i32
    %c0_i32_0 = arith.constant 0 : i32
    return %arg0, %c0_i32 : i32, i32
  }
}

</mosaic_0001>

<llo_original>
// kernel: tpu_custom_call.1
$region0: #{tpu_custom_call.1}
  #allocation0 [shape = 'u32[]', space=smem, size = 0x4, offset = 0x4, fixed_abs, tag = 'smem constant byte address 0x4 - core index']
  #allocation1 [shape = 'u32[144,128]{1,0:T(1,128)}', space=vmem, size = 0x12000, scoped, tag = 'internal scratch']
  %s0 = inlined_call_operand.vmem [shape: f32[8,4], index: 0, kind: input, shape index: {}]
  %s1 = inlined_call_operand.vmem [shape: f32[4,4], index: 1, kind: input, shape index: {}]
  %s2 = inlined_call_operand.vmem [shape: f32[1,4], index: 2, kind: input, shape index: {}]
  %s3 = inlined_call_operand.vmem [shape: f32[4,20], index: 3, kind: input, shape index: {}]
  %s4 = inlined_call_operand.vmem [shape: f32[1,20], index: 4, kind: input, shape index: {}]
  %s5 = inlined_call_operand.vmem [shape: f32[20,4], index: 5, kind: input, shape index: {}]
  %s6 = inlined_call_operand.vmem [shape: f32[1,4], index: 6, kind: input, shape index: {}]
  %s7 = inlined_call_operand.vmem [shape: f32[4,128], index: 7, kind: input, shape index: {}]
  %s8 = inlined_call_operand.vmem [shape: f32[1,128], index: 8, kind: input, shape index: {}]
  %s9 = inlined_call_operand.hbm [shape: f32[8,128], index: 9, kind: output, shape index: {}]
  %s10 = sld [smem:[#allocation0]]
  $region46: #{tpu_custom_call.1} parent=0
    _
  %s12 = ssub.s32 1, %s10
  %s13 = scalar_select 0, %s12, %s10
  $region1: #{tpu_custom_call.1} parent=0
    #allocation2 [shape = 'u8[4096]{0}', space=vmem, size = 0x1000, scoped, tag = 'output window, operand 0, single buffered']
    #allocation3 [shape = 's32[1]{0}', space=sflag, size = 0x4, scoped, tag = 'scoped memory for tpu_custom_call.1']
    %14 = vsyncpa [#allocation3], 0
    // Predicated region
    $region2: #{tpu_custom_call.1} parent=1 // pred_check
      _
    $region3: #{tpu_custom_call.1} parent=1 // pred_check_branch
      %16 = sbr.rel (0) target = $region5
    $region4: #{tpu_custom_call.1} parent=1 // pred_region
      _
    $region5: #{tpu_custom_call.1} parent=1 // pred_fallthru
      _
    // Predicated region
    $region6: #{tpu_custom_call.1} parent=1 // pred_check
      _
    $region7: #{tpu_custom_call.1} parent=1 // pred_check_branch
      %18 = sbr.rel (0) target = $region9
    $region8: #{tpu_custom_call.1} parent=1 // pred_region
      _
    $region9: #{tpu_custom_call.1} parent=1 // pred_fallthru
      _
    // Predicated region
    $region10: #{tpu_custom_call.1} parent=1 // pred_check
      _
    $region11: #{tpu_custom_call.1} parent=1 // pred_check_branch
      %20 = sbr.rel (0) target = $region13
    $region12: #{tpu_custom_call.1} parent=1 // pred_region
      _
    $region13: #{tpu_custom_call.1} parent=1 // pred_fallthru
      _
    // Predicated region
    $region14: #{tpu_custom_call.1} parent=1 // pred_check
      _
    $region15: #{tpu_custom_call.1} parent=1 // pred_check_branch
      %22 = sbr.rel (0) target = $region17
    $region16: #{tpu_custom_call.1} parent=1 // pred_region
      _
    $region17: #{tpu_custom_call.1} parent=1 // pred_fallthru
      _
    // Predicated region
    $region18: #{tpu_custom_call.1} parent=1 // pred_check
      _
    $region19: #{tpu_custom_call.1} parent=1 // pred_check_branch
      %24 = sbr.rel (0) target = $region21
    $region20: #{tpu_custom_call.1} parent=1 // pred_region
      _
    $region21: #{tpu_custom_call.1} parent=1 // pred_fallthru
      _
    // Predicated region
    $region22: #{tpu_custom_call.1} parent=1 // pred_check
      _
    $region23: #{tpu_custom_call.1} parent=1 // pred_check_branch
      %26 = sbr.rel (0) target = $region25
    $region24: #{tpu_custom_call.1} parent=1 // pred_region
      _
    $region25: #{tpu_custom_call.1} parent=1 // pred_fallthru
      _
    // Predicated region
    $region26: #{tpu_custom_call.1} parent=1 // pred_check
      _
    $region27: #{tpu_custom_call.1} parent=1 // pred_check_branch
      %28 = sbr.rel (0) target = $region29
    $region28: #{tpu_custom_call.1} parent=1 // pred_region
      _
    $region29: #{tpu_custom_call.1} parent=1 // pred_fallthru
      _
    // Predicated region
    $region30: #{tpu_custom_call.1} parent=1 // pred_check
      _
    $region31: #{tpu_custom_call.1} parent=1 // pred_check_branch
      %30 = sbr.rel (0) target = $region33
    $region32: #{tpu_custom_call.1} parent=1 // pred_region
      _
    $region33: #{tpu_custom_call.1} parent=1 // pred_fallthru
      _
    // Predicated region
    $region34: #{tpu_custom_call.1} parent=1 // pred_check
      _
    $region35: #{tpu_custom_call.1} parent=1 // pred_check_branch
      %32 = sbr.rel (0) target = $region37
    $region36: #{tpu_custom_call.1} parent=1 // pred_region
      _
    $region37: #{tpu_custom_call.1} parent=1 // pred_fallthru
      _
    %v33 = vld [vmem:[%s0] sm:$0xff]
    %v34 = vld [vmem:[%s1] sm:$0xf]
    %v35 = vld [vmem:[%s2] sm:$0x1]
    %v37 = vlaneseq
    %v38 = vshrl.u32 %v37, 7
    %v39 = vsub.s32 0, %v38
    %v40 = vrot.slane %v35, %v39
    %vm42 = vcmask 31744
    %v44 = vsel %vm42, %v33, 0
    %vm46 = vcmask 1043456
    %v48 = vsel %vm46, %v34, 0
    %50 = vmatprep.subr.mxu0 0.0
    %51 = vmatpush1.msra.mxu0 %v48
    %52 = vmatprep.subr.mxu0 0.0
    %53 = vmatpush1.msra.mxu0 0.0
    %54 = vmatprep.subr.mxu0 0.0
    %55 = vmatpush1.msra.mxu0 0.0
    %56 = vmatprep.subr.mxu0 0.0
    %57 = vmatpush1.msra.mxu0 0.0
    %58 = vmatprep.subr.mxu0 0.0
    %59 = vmatpush1.msra.mxu0 0.0
    %60 = vmatprep.subr.mxu0 0.0
    %61 = vmatpush1.msra.mxu0 0.0
    %62 = vmatprep.subr.mxu0 0.0
    %63 = vmatpush1.msra.mxu0 0.0
    %64 = vmatprep.subr.mxu0 0.0
    %65 = vmatpush1.msra.mxu0 0.0
    %66 = vmatprep.subr.mxu0 0.0
    %67 = vmatpush1.msra.mxu0 0.0
    %68 = vmatprep.subr.mxu0 0.0
    %69 = vmatpush1.msra.mxu0 0.0
    %70 = vmatprep.subr.mxu0 0.0
    %71 = vmatpush1.msra.mxu0 0.0
    %72 = vmatprep.subr.mxu0 0.0
    %73 = vmatpush1.msra.mxu0 0.0
    %74 = vmatprep.subr.mxu0 0.0
    %75 = vmatpush1.msra.mxu0 0.0
    %76 = vmatprep.subr.mxu0 0.0
    %77 = vmatpush1.msra.mxu0 0.0
    %78 = vmatprep.subr.mxu0 0.0
    %79 = vmatpush1.msra.mxu0 0.0
    %80 = vmatprep.subr.mxu0 0.0
    %81 = vmatpush1.msra.mxu0 0.0
    %82 = vmatprep.subr.mxu0 0.0
    %83 = vmatpush1.msra.mxu0 0.0
    %84 = vmatprep.subr.mxu0 0.0
    %85 = vmatpush1.msra.mxu0 0.0
    %86 = vmatprep.subr.mxu0 0.0
    %87 = vmatpush1.msra.mxu0 0.0
    %88 = vmatprep.subr.mxu0 0.0
    %89 = vmatpush1.msra.mxu0 0.0
    %90 = vmatprep.subr.mxu0 0.0
    %91 = vmatpush1.msra.mxu0 0.0
    %92 = vmatprep.subr.mxu0 0.0
    %93 = vmatpush1.msra.mxu0 0.0
    %94 = vmatprep.subr.mxu0 0.0
    %95 = vmatpush1.msra.mxu0 0.0
    %96 = vmatprep.subr.mxu0 0.0
    %97 = vmatpush1.msra.mxu0 0.0
    %98 = vmatprep.subr.mxu0 0.0
    %99 = vmatpush1.msra.mxu0 0.0
    %100 = vmatprep.subr.mxu0 0.0
    %101 = vmatpush1.msra.mxu0 0.0
    %102 = vmatprep.subr.mxu0 0.0
    %103 = vmatpush1.msra.mxu0 0.0
    %104 = vmatprep.subr.mxu0 0.0
    %105 = vmatpush1.msra.mxu0 0.0
    %106 = vmatprep.subr.mxu0 0.0
    %107 = vmatpush1.msra.mxu0 0.0
    %108 = vmatprep.subr.mxu0 0.0
    %109 = vmatpush1.msra.mxu0 0.0
    %110 = vmatprep.subr.mxu0 0.0
    %111 = vmatpush1.msra.mxu0 0.0
    %112 = vmatprep.subr.mxu0 0.0
    %113 = vmatpush1.msra.mxu0 0.0
    %114 = vmatprep.mubr.f32.mxu0 0.0
    %115 = vmatmul.mubr.f32.gmra.mrb[0].mxu0 %v44
    %v116 = vpop.f32.mrb[0].mxu0
    %v117 = vadd.f32 %v40, %v116
    %v118 = vpop.f32.mrb[0].mxu0
    %119 = vdwg.mxu0
    %v120 = vmax.f32 %v117, 0.0
    %v121 = vld [vmem:[%s3] sm:$0xf]
    %v122 = vld [vmem:[%s4] sm:$0x1]
    %v124 = vlaneseq
    %v125 = vshrl.u32 %v124, 7
    %v126 = vsub.s32 0, %v125
    %v127 = vrot.slane %v122, %v126
    %v130 = vsel %vm42, %v120, 0
    %v133 = vsel %vm46, %v121, 0
    %135 = vmatprep.subr.mxu0 0.0
    %136 = vmatpush1.msra.mxu0 %v133
    %137 = vmatprep.subr.mxu0 0.0
    %138 = vmatpush1.msra.mxu0 0.0
    %139 = vmatprep.subr.mxu0 0.0
    %140 = vmatpush1.msra.mxu0 0.0
    %141 = vmatprep.subr.mxu0 0.0
    %142 = vmatpush1.msra.mxu0 0.0
    %143 = vmatprep.subr.mxu0 0.0
    %144 = vmatpush1.msra.mxu0 0.0
    %145 = vmatprep.subr.mxu0 0.0
    %146 = vmatpush1.msra.mxu0 0.0
    %147 = vmatprep.subr.mxu0 0.0
    %148 = vmatpush1.msra.mxu0 0.0
    %149 = vmatprep.subr.mxu0 0.0
    %150 = vmatpush1.msra.mxu0 0.0
    %151 = vmatprep.subr.mxu0 0.0
    %152 = vmatpush1.msra.mxu0 0.0
    %153 = vmatprep.subr.mxu0 0.0
    %154 = vmatpush1.msra.mxu0 0.0
    %155 = vmatprep.subr.mxu0 0.0
    %156 = vmatpush1.msra.mxu0 0.0
    %157 = vmatprep.subr.mxu0 0.0
    %158 = vmatpush1.msra.mxu0 0.0
    %159 = vmatprep.subr.mxu0 0.0
    %160 = vmatpush1.msra.mxu0 0.0
    %161 = vmatprep.subr.mxu0 0.0
    %162 = vmatpush1.msra.mxu0 0.0
    %163 = vmatprep.subr.mxu0 0.0
    %164 = vmatpush1.msra.mxu0 0.0
    %165 = vmatprep.subr.mxu0 0.0
    %166 = vmatpush1.msra.mxu0 0.0
    %167 = vmatprep.subr.mxu0 0.0
    %168 = vmatpush1.msra.mxu0 0.0
    %169 = vmatprep.subr.mxu0 0.0
    %170 = vmatpush1.msra.mxu0 0.0
    %171 = vmatprep.subr.mxu0 0.0
    %172 = vmatpush1.msra.mxu0 0.0
    %173 = vmatprep.subr.mxu0 0.0
    %174 = vmatpush1.msra.mxu0 0.0
    %175 = vmatprep.subr.mxu0 0.0
    %176 = vmatpush1.msra.mxu0 0.0
    %177 = vmatprep.subr.mxu0 0.0
    %178 = vmatpush1.msra.mxu0 0.0
    %179 = vmatprep.subr.mxu0 0.0
    %180 = vmatpush1.msra.mxu0 0.0
    %181 = vmatprep.subr.mxu0 0.0
    %182 = vmatpush1.msra.mxu0 0.0
    %183 = vmatprep.subr.mxu0 0.0
    %184 = vmatpush1.msra.mxu0 0.0
    %185 = vmatprep.subr.mxu0 0.0
    %186 = vmatpush1.msra.mxu0 0.0
    %187 = vmatprep.subr.mxu0 0.0
    %188 = vmatpush1.msra.mxu0 0.0
    %189 = vmatprep.subr.mxu0 0.0
    %190 = vmatpush1.msra.mxu0 0.0
    %191 = vmatprep.subr.mxu0 0.0
    %192 = vmatpush1.msra.mxu0 0.0
    %193 = vmatprep.subr.mxu0 0.0
    %194 = vmatpush1.msra.mxu0 0.0
    %195 = vmatprep.subr.mxu0 0.0
    %196 = vmatpush1.msra.mxu0 0.0
    %197 = vmatprep.subr.mxu0 0.0
    %198 = vmatpush1.msra.mxu0 0.0
    %199 = vmatprep.mubr.f32.mxu0 0.0
    %200 = vmatmul.mubr.f32.gmra.mrb[0].mxu0 %v130
    %v201 = vpop.f32.mrb[0].mxu0
    %v202 = vadd.f32 %v127, %v201
    %v203 = vpop.f32.mrb[0].mxu0
    %204 = vdwg.mxu0
    %v205 = vmax.f32 %v202, 0.0
    %v206 = vld [vmem:[%s5] sm:$0xff]
    %v207 = vld [vmem:[%s5 + $0x8] sm:$0xff]
    %v208 = vld [vmem:[%s5 + $0x10] sm:$0xf]
    %v209 = vld [vmem:[%s6] sm:$0x1]
    %v211 = vlaneseq
    %v212 = vshrl.u32 %v211, 7
    %v213 = vsub.s32 0, %v212
    %v214 = vrot.slane %v209, %v213
    %vm216 = vcmask 162816
    %v218 = vsel %vm216, %v205, 0
    %v221 = vsel %vm46, %v208, 0
    %223 = vmatprep.subr.mxu0 0.0
    %224 = vmatpush1.msra.mxu0 %v206
    %225 = vmatprep.subr.mxu0 0.0
    %226 = vmatpush1.msra.mxu0 %v207
    %227 = vmatprep.subr.mxu0 0.0
    %228 = vmatpush1.msra.mxu0 %v221
    %229 = vmatprep.subr.mxu0 0.0
    %230 = vmatpush1.msra.mxu0 0.0
    %231 = vmatprep.subr.mxu0 0.0
    %232 = vmatpush1.msra.mxu0 0.0
    %233 = vmatprep.subr.mxu0 0.0
    %234 = vmatpush1.msra.mxu0 0.0
    %235 = vmatprep.subr.mxu0 0.0
    %236 = vmatpush1.msra.mxu0 0.0
    %237 = vmatprep.subr.mxu0 0.0
    %238 = vmatpush1.msra.mxu0 0.0
    %239 = vmatprep.subr.mxu0 0.0
    %240 = vmatpush1.msra.mxu0 0.0
    %241 = vmatprep.subr.mxu0 0.0
    %242 = vmatpush1.msra.mxu0 0.0
    %243 = vmatprep.subr.mxu0 0.0
    %244 = vmatpush1.msra.mxu0 0.0
    %245 = vmatprep.subr.mxu0 0.0
    %246 = vmatpush1.msra.mxu0 0.0
    %247 = vmatprep.subr.mxu0 0.0
    %248 = vmatpush1.msra.mxu0 0.0
    %249 = vmatprep.subr.mxu0 0.0
    %250 = vmatpush1.msra.mxu0 0.0
    %251 = vmatprep.subr.mxu0 0.0
    %252 = vmatpush1.msra.mxu0 0.0
    %253 = vmatprep.subr.mxu0 0.0
    %254 = vmatpush1.msra.mxu0 0.0
    %255 = vmatprep.subr.mxu0 0.0
    %256 = vmatpush1.msra.mxu0 0.0
    %257 = vmatprep.subr.mxu0 0.0
    %258 = vmatpush1.msra.mxu0 0.0
    %259 = vmatprep.subr.mxu0 0.0
    %260 = vmatpush1.msra.mxu0 0.0
    %261 = vmatprep.subr.mxu0 0.0
    %262 = vmatpush1.msra.mxu0 0.0
    %263 = vmatprep.subr.mxu0 0.0
    %264 = vmatpush1.msra.mxu0 0.0
    %265 = vmatprep.subr.mxu0 0.0
    %266 = vmatpush1.msra.mxu0 0.0
    %267 = vmatprep.subr.mxu0 0.0
    %268 = vmatpush1.msra.mxu0 0.0
    %269 = vmatprep.subr.mxu0 0.0
    %270 = vmatpush1.msra.mxu0 0.0
    %271 = vmatprep.subr.mxu0 0.0
    %272 = vmatpush1.msra.mxu0 0.0
    %273 = vmatprep.subr.mxu0 0.0
    %274 = vmatpush1.msra.mxu0 0.0
    %275 = vmatprep.subr.mxu0 0.0
    %276 = vmatpush1.msra.mxu0 0.0
    %277 = vmatprep.subr.mxu0 0.0
    %278 = vmatpush1.msra.mxu0 0.0
    %279 = vmatprep.subr.mxu0 0.0
    %280 = vmatpush1.msra.mxu0 0.0
    %281 = vmatprep.subr.mxu0 0.0
    %282 = vmatpush1.msra.mxu0 0.0
    %283 = vmatprep.subr.mxu0 0.0
    %284 = vmatpush1.msra.mxu0 0.0
    %285 = vmatprep.subr.mxu0 0.0
    %286 = vmatpush1.msra.mxu0 0.0
    %287 = vmatprep.mubr.f32.mxu0 0.0
    %288 = vmatmul.mubr.f32.gmra.mrb[0].mxu0 %v218
    %v289 = vpop.f32.mrb[0].mxu0
    %v290 = vadd.f32 %v214, %v289
    %v291 = vpop.f32.mrb[0].mxu0
    %292 = vdwg.mxu0
    %v293 = vld [vmem:[%s7] sm:$0xf]
    %v294 = vld [vmem:[%s8] sm:$0x1]
    %v296 = vlaneseq
    %v297 = vshrl.u32 %v296, 7
    %v298 = vsub.s32 0, %v297
    %v299 = vrot.slane %v294, %v298
    %v302 = vsel %vm42, %v290, 0
    %v305 = vsel %vm46, %v293, 0
    %307 = vmatprep.subr.mxu0 0.0
    %308 = vmatpush1.msra.mxu0 %v305
    %309 = vmatprep.subr.mxu0 0.0
    %310 = vmatpush1.msra.mxu0 0.0
    %311 = vmatprep.subr.mxu0 0.0
    %312 = vmatpush1.msra.mxu0 0.0
    %313 = vmatprep.subr.mxu0 0.0
    %314 = vmatpush1.msra.mxu0 0.0
    %315 = vmatprep.subr.mxu0 0.0
    %316 = vmatpush1.msra.mxu0 0.0
    %317 = vmatprep.subr.mxu0 0.0
    %318 = vmatpush1.msra.mxu0 0.0
    %319 = vmatprep.subr.mxu0 0.0
    %320 = vmatpush1.msra.mxu0 0.0
    %321 = vmatprep.subr.mxu0 0.0
    %322 = vmatpush1.msra.mxu0 0.0
    %323 = vmatprep.subr.mxu0 0.0
    %324 = vmatpush1.msra.mxu0 0.0
    %325 = vmatprep.subr.mxu0 0.0
    %326 = vmatpush1.msra.mxu0 0.0
    %327 = vmatprep.subr.mxu0 0.0
    %328 = vmatpush1.msra.mxu0 0.0
    %329 = vmatprep.subr.mxu0 0.0
    %330 = vmatpush1.msra.mxu0 0.0
    %331 = vmatprep.subr.mxu0 0.0
    %332 = vmatpush1.msra.mxu0 0.0
    %333 = vmatprep.subr.mxu0 0.0
    %334 = vmatpush1.msra.mxu0 0.0
    %335 = vmatprep.subr.mxu0 0.0
    %336 = vmatpush1.msra.mxu0 0.0
    %337 = vmatprep.subr.mxu0 0.0
    %338 = vmatpush1.msra.mxu0 0.0
    %339 = vmatprep.subr.mxu0 0.0
    %340 = vmatpush1.msra.mxu0 0.0
    %341 = vmatprep.subr.mxu0 0.0
    %342 = vmatpush1.msra.mxu0 0.0
    %343 = vmatprep.subr.mxu0 0.0
    %344 = vmatpush1.msra.mxu0 0.0
    %345 = vmatprep.subr.mxu0 0.0
    %346 = vmatpush1.msra.mxu0 0.0
    %347 = vmatprep.subr.mxu0 0.0
    %348 = vmatpush1.msra.mxu0 0.0
    %349 = vmatprep.subr.mxu0 0.0
    %350 = vmatpush1.msra.mxu0 0.0
    %351 = vmatprep.subr.mxu0 0.0
    %352 = vmatpush1.msra.mxu0 0.0
    %353 = vmatprep.subr.mxu0 0.0
    %354 = vmatpush1.msra.mxu0 0.0
    %355 = vmatprep.subr.mxu0 0.0
    %356 = vmatpush1.msra.mxu0 0.0
    %357 = vmatprep.subr.mxu0 0.0
    %358 = vmatpush1.msra.mxu0 0.0
    %359 = vmatprep.subr.mxu0 0.0
    %360 = vmatpush1.msra.mxu0 0.0
    %361 = vmatprep.subr.mxu0 0.0
    %362 = vmatpush1.msra.mxu0 0.0
    %363 = vmatprep.subr.mxu0 0.0
    %364 = vmatpush1.msra.mxu0 0.0
    %365 = vmatprep.subr.mxu0 0.0
    %366 = vmatpush1.msra.mxu0 0.0
    %367 = vmatprep.subr.mxu0 0.0
    %368 = vmatpush1.msra.mxu0 0.0
    %369 = vmatprep.subr.mxu0 0.0
    %370 = vmatpush1.msra.mxu0 0.0
    %371 = vmatprep.mubr.f32.mxu0 0.0
    %372 = vmatmul.mubr.f32.gmra.mrb[0].mxu0 %v302
    %v373 = vpop.f32.mrb[0].mxu0
    %v374 = vadd.f32 %v299, %v373
    %v375 = vpop.f32.mrb[0].mxu0
    %376 = vdwg.mxu0
    %377 = vmax.xlane.f32.xlu0 %v374
    %v378 = vpop.xlane.xlu0 %377
    %v379 = vsub.f32 %v374, %v378
    %v380 = vmul.f32 %v379, 1.442695
    %v381 = vpow.pop %v380
    %382 = vadd.xlane.f32.xlu0 %v381
    %v383 = vpop.xlane.xlu0 %382
    %v384 = vrcp.pop %v383
    %v385 = vmul.f32 %v381, %v384
    %386 = vst [vmem:[#allocation2] sm:$0xff] %v385
    // Predicated region
    $region38: #{tpu_custom_call.1} parent=1 // pred_check
      _
    $region39: #{tpu_custom_call.1} parent=1 // pred_check_branch
      %388 = sbr.rel (0) target = $region41
    $region40: #{tpu_custom_call.1} parent=1 // pred_region
      %s390 = ssub.s32 128, 128
      %391 = vsyncadd [#allocation3], %s390
      %s393 = sshll.u32 [#allocation2], 4
      %s394 = int_to_ptr.vmem [resolvable:$true] %s393
      %396 = dma.vmem_to_hbm [thread:$0]  %s394, 128, %s9, [#allocation3]
    $region41: #{tpu_custom_call.1} parent=1 // pred_fallthru
      _
    // Predicated region
    $region42: #{tpu_custom_call.1} parent=1 // pred_check
      _
    $region43: #{tpu_custom_call.1} parent=1 // pred_check_branch
      %398 = sbr.rel (0) target = $region45
    $region44: #{tpu_custom_call.1} parent=1 // pred_region
      %399 = dma.done [#allocation3], 128
    $region45: #{tpu_custom_call.1} parent=1 // pred_fallthru
      _
    %400 = vsyncpa [#allocation3], 1

</llo_original>
